<compile_context>
chip_gen: v7x
topology: tpu7x:2x2x1
jax: 0.10.0
libtpu: 0.0.40
codegen_flags: <defaults>
</compile_context>

<pallas_src>
import jax
import jax.numpy as jnp
from jax.experimental import pallas as pl
from jax.experimental.pallas import tpu as pltpu


def temporal_attention_kernel(z_ref, a_rep_ref, s_sum_ref, b_rep_ref, g_sum_ref,
                              out_ref):
    # z_ref     : (Bn, T*D)  lane-dense slab, z[b, t*D + e] = z[b, t, e]
    # a_rep_ref : (D, T*D)   (W^T W) tiled T times along columns
    # s_sum_ref : (T*D, T)   0/1, sums each D-lane group -> per-time score
    # b_rep_ref : (T, T*D)   0/1, broadcasts lam[b,t] across its D-lane group
    # g_sum_ref : (T*D, D)   0/1, sums over time for each feature
    # out_ref   : (Bn, D)
    d = a_rep_ref.shape[0]
    td = z_ref.shape[1]
    t = td // d

    z = z_ref[...]                                            # (Bn, T*D)

    # u_rep[b, t*D+e] = u[b, e] = sum_f z[b, T-1, f] * (W^T W)[f, e]
    z_last = z[:, (t - 1) * d:]                               # (Bn, D)
    u_rep = jnp.dot(z_last, a_rep_ref[...],
                    preferred_element_type=jnp.float32)       # (Bn, T*D)

    # scores[b, k] = sum_e z[b, k, e] * u[b, e]  ( = <h[b,k,:], h[b,-1,:]> )
    s = jnp.dot(z * u_rep, s_sum_ref[...],
                preferred_element_type=jnp.float32)           # (Bn, T)

    # Softmax over time (exact divide; EUP/VPU have slack in an HBM-bound kernel).
    m = jnp.max(s, axis=-1, keepdims=True)
    e = jnp.exp(s - m)
    lam = e / jnp.sum(e, axis=-1, keepdims=True)              # (Bn, T)

    # output[b, e] = sum_k lam[b, k] * z[b, k, e]
    lam_rep = jnp.dot(lam, b_rep_ref[...],
                      preferred_element_type=jnp.float32)     # (Bn, T*D)
    out = jnp.dot(lam_rep * z, g_sum_ref[...],
                  preferred_element_type=jnp.float32)         # (Bn, D)
    out_ref[...] = out.astype(out_ref.dtype)


def _choose_block_n(n, *, max_rows=1024):
    """Lane-dense z block is exactly block_n KiB (T*D=256 f32 lanes, no padding).
    1024 rows (1 MiB) sits on the HBM-efficiency plateau and, with ~4 f32
    (Bn,256) intermediates + double-buffered I/O, stays well under v5e's 16 MiB
    scoped VMEM.  N >= 2*max_rows automatically gives >=2 'parallel' grid steps
    (>=4 for N >= 4*max_rows) so both v7x TensorCores are used on big batches."""
    steps = pl.cdiv(n, max_rows)
    bn = pl.cdiv(n, steps)
    return pl.cdiv(bn, 8) * 8          # sublane multiple


def temporal_attention(z, w, *, block_n=None):
    """z: (N, T, D) float32; w: (D, D) PyTorch Linear weight (out, in)."""
    n, t, d = z.shape
    td = t * d
    assert w.shape == (d, d)

    # One-time constant operands (resident in VMEM via constant index_maps).
    a = jnp.matmul(w.T, w)                                    # (D, D) = W^T W
    a_rep = jnp.tile(a, (1, t))                               # (D, T*D)
    s_sum = jnp.repeat(jnp.eye(t, dtype=z.dtype), d, axis=0)  # (T*D, T)
    b_rep = s_sum.T                                           # (T, T*D)
    g_sum = jnp.tile(jnp.eye(d, dtype=z.dtype), (t, 1))       # (T*D, D)

    z2d = z.reshape(n, td)                                    # free, row-major

    if block_n is None:
        block_n = _choose_block_n(n)
    block_n = max(8, pl.cdiv(block_n, 8) * 8)

    # Pad awkward batch sizes up to a block multiple (padded rows -> uniform
    # softmax over zeros -> zero output; sliced off below).
    n_pad = pl.cdiv(n, block_n) * block_n
    if n_pad != n:
        z2d = jnp.pad(z2d, ((0, n_pad - n), (0, 0)))

    out = pl.pallas_call(
        temporal_attention_kernel,
        out_shape=jax.ShapeDtypeStruct((n_pad, d), z.dtype),
        grid_spec=pltpu.PrefetchScalarGridSpec(
            num_scalar_prefetch=0,
            grid=(n_pad // block_n,),
            in_specs=[
                pl.BlockSpec((block_n, td), lambda i: (i, 0)),
                # Constant index_maps -> weights stay resident across steps.
                pl.BlockSpec((d, td), lambda i: (0, 0)),
                pl.BlockSpec((td, t), lambda i: (0, 0)),
                pl.BlockSpec((t, td), lambda i: (0, 0)),
                pl.BlockSpec((td, d), lambda i: (0, 0)),
            ],
            out_specs=pl.BlockSpec((block_n, d), lambda i: (i, 0)),
        ),
        compiler_params=pltpu.CompilerParams(
            dimension_semantics=("parallel",),
        ),
    )(z2d, a_rep, s_sum, b_rep, g_sum)

    return out[:n] if n_pad != n else out


def reference(z, w):
    """Pure-JAX reference mirroring the PyTorch forward exactly."""
    h = jnp.einsum("ntd,ed->nte", z, w)            # Linear: z @ W.T
    lam = jnp.einsum("nte,ne->nt", h, h[:, -1, :])
    lam = jax.nn.softmax(lam, axis=1)
    return jnp.einsum("nt,ntd->nd", lam, z)


if __name__ == "__main__":
    key = jax.random.PRNGKey(0)
    k_z, k_w, k_z2 = jax.random.split(key, 3)

    # Small config matching the module scale: batch=2, seq=8, d_model=32.
    N, T, D = 2, 8, 32
    z = jax.random.normal(k_z, (N, T, D), dtype=jnp.float32)
    bound = 1.0 / (D ** 0.5)   # mimics nn.Linear's default uniform init
    w = jax.random.uniform(k_w, (D, D), dtype=jnp.float32,
                           minval=-bound, maxval=bound)

    out = jax.block_until_ready(temporal_attention(z, w))
    ref = reference(z, w)
    assert out.shape == (N, D)
    # Softmax is now exact; remaining slack covers default MXU matmul precision
    # (in both the kernel and the reference) on the K=32/K=256 contractions.
    assert jnp.allclose(out, ref, atol=5e-3, rtol=5e-3), (
        f"max err {jnp.max(jnp.abs(out - ref))}")

    # Larger, non-divisible batch: exercises the padding path and a multi-step
    # "parallel" grid (3 blocks of 840 rows for N=2500).
    N2 = 2500
    z2 = jax.random.normal(k_z2, (N2, T, D), dtype=jnp.float32)
    out2 = jax.block_until_ready(temporal_attention(z2, w))
    ref2 = reference(z2, w)
    assert out2.shape == (N2, D)
    assert jnp.allclose(out2, ref2, atol=5e-3, rtol=5e-3), (
        f"max err {jnp.max(jnp.abs(out2 - ref2))}")

    print("KERNEL_OK")
</pallas_src>

<mosaic_0001>
module attributes {stable_mosaic.version = 11 : i64} {
  func.func @temporal_attention_kernel(%arg0: i32, %arg1: memref<8x256xf32, #tpu.memory_space<vmem>>, %arg2: memref<32x256xf32, #tpu.memory_space<vmem>>, %arg3: memref<256x8xf32, #tpu.memory_space<vmem>>, %arg4: memref<8x256xf32, #tpu.memory_space<vmem>>, %arg5: memref<256x32xf32, #tpu.memory_space<vmem>>, %arg6: memref<8x32xf32, #tpu.memory_space<vmem>>) attributes {dimension_semantics = [#tpu.dimension_semantics<parallel>], iteration_bounds = array<i64: 1>, scalar_prefetch = 0 : i64, scratch_operands = 0 : i64, tpu.core_type = #tpu.core_type<tc>, window_params = [{transform_indices = @transform_0, window_bounds = array<i64: 8, 256>}, {pipeline_mode = #tpu.pipeline_mode<synchronous>, transform_indices = @transform_1, window_bounds = array<i64: 32, 256>}, {pipeline_mode = #tpu.pipeline_mode<synchronous>, transform_indices = @transform_2, window_bounds = array<i64: 256, 8>}, {pipeline_mode = #tpu.pipeline_mode<synchronous>, transform_indices = @transform_3, window_bounds = array<i64: 8, 256>}, {pipeline_mode = #tpu.pipeline_mode<synchronous>, transform_indices = @transform_4, window_bounds = array<i64: 256, 32>}, {transform_indices = @transform_5, window_bounds = array<i64: 8, 32>}]} {
    %c0 = arith.constant 0 : index
    %c0_0 = arith.constant 0 : index
    %0 = vector.load %arg1[%c0, %c0_0] : memref<8x256xf32, #tpu.memory_space<vmem>>, vector<8x256xf32>
    %1 = vector.extract_strided_slice %0 {offsets = [0, 224], sizes = [8, 32], strides = [1, 1]} : vector<8x256xf32> to vector<8x32xf32>
    %c0_1 = arith.constant 0 : index
    %c0_2 = arith.constant 0 : index
    %2 = vector.load %arg2[%c0_1, %c0_2] : memref<32x256xf32, #tpu.memory_space<vmem>>, vector<32x256xf32>
    %cst = arith.constant dense<0.000000e+00> : vector<8x256xf32>
    %3 = tpu.matmul %1, %2, %cst {dimension_numbers = #tpu.dot_dimension_numbers<[1], [0], [0], [1], [0, 0, 1, 1], [], []>} : vector<8x32xf32>, vector<32x256xf32>, vector<8x256xf32> -> vector<8x256xf32>
    %4 = arith.mulf %0, %3 : vector<8x256xf32>
    %c0_3 = arith.constant 0 : index
    %c0_4 = arith.constant 0 : index
    %5 = vector.load %arg3[%c0_3, %c0_4] : memref<256x8xf32, #tpu.memory_space<vmem>>, vector<256x8xf32>
    %cst_5 = arith.constant dense<0.000000e+00> : vector<8x8xf32>
    %6 = tpu.matmul %4, %5, %cst_5 {dimension_numbers = #tpu.dot_dimension_numbers<[1], [0], [0], [1], [0, 0, 1, 1], [], []>} : vector<8x256xf32>, vector<256x8xf32>, vector<8x8xf32> -> vector<8x8xf32>
    %cst_6 = arith.constant dense<0xFF800000> : vector<8xf32>
    %7 = vector.multi_reduction <maximumf>, %6, %cst_6 [1] : vector<8x8xf32> to vector<8xf32>
    %8 = vector.shape_cast %7 : vector<8xf32> to vector<8x1xf32>
    %9 = vector.broadcast %8 : vector<8x1xf32> to vector<8x8xf32>
    %10 = arith.subf %6, %9 : vector<8x8xf32>
    %11 = math.exp %10 : vector<8x8xf32>
    %cst_7 = arith.constant dense<0.000000e+00> : vector<8xf32>
    %12 = vector.multi_reduction <add>, %11, %cst_7 [1] : vector<8x8xf32> to vector<8xf32>
    %13 = vector.shape_cast %12 : vector<8xf32> to vector<8x1xf32>
    %14 = vector.broadcast %13 : vector<8x1xf32> to vector<8x8xf32>
    %15 = arith.divf %11, %14 : vector<8x8xf32>
    %c0_8 = arith.constant 0 : index
    %c0_9 = arith.constant 0 : index
    %16 = vector.load %arg4[%c0_8, %c0_9] : memref<8x256xf32, #tpu.memory_space<vmem>>, vector<8x256xf32>
    %cst_10 = arith.constant dense<0.000000e+00> : vector<8x256xf32>
    %17 = tpu.matmul %15, %16, %cst_10 {dimension_numbers = #tpu.dot_dimension_numbers<[1], [0], [0], [1], [0, 0, 1, 1], [], []>} : vector<8x8xf32>, vector<8x256xf32>, vector<8x256xf32> -> vector<8x256xf32>
    %18 = arith.mulf %17, %0 : vector<8x256xf32>
    %c0_11 = arith.constant 0 : index
    %c0_12 = arith.constant 0 : index
    %19 = vector.load %arg5[%c0_11, %c0_12] : memref<256x32xf32, #tpu.memory_space<vmem>>, vector<256x32xf32>
    %cst_13 = arith.constant dense<0.000000e+00> : vector<8x32xf32>
    %20 = tpu.matmul %18, %19, %cst_13 {dimension_numbers = #tpu.dot_dimension_numbers<[1], [0], [0], [1], [0, 0, 1, 1], [], []>} : vector<8x256xf32>, vector<256x32xf32>, vector<8x32xf32> -> vector<8x32xf32>
    %c0_14 = arith.constant 0 : index
    %c0_15 = arith.constant 0 : index
    %21 = vector.load %arg6[%c0_14, %c0_15] : memref<8x32xf32, #tpu.memory_space<vmem>>, vector<8x32xf32>
    tpu.vector_store %arg6[%c0_14, %c0_15], %20 {strides = array<i32>} : memref<8x32xf32, #tpu.memory_space<vmem>>, vector<8x32xf32>,
    return
  }
  func.func @transform_0(%arg0: i32) -> (i32, i32) {
    %c0_i32 = arith.constant 0 : i32
    %c0_i32_0 = arith.constant 0 : i32
    return %arg0, %c0_i32 : i32, i32
  }
  func.func @transform_1(%arg0: i32) -> (i32, i32) {
    %c0_i32 = arith.constant 0 : i32
    %c0_i32_0 = arith.constant 0 : i32
    %c0_i32_1 = arith.constant 0 : i32
    return %c0_i32, %c0_i32_0 : i32, i32
  }
  func.func @transform_2(%arg0: i32) -> (i32, i32) {
    %c0_i32 = arith.constant 0 : i32
    %c0_i32_0 = arith.constant 0 : i32
    %c0_i32_1 = arith.constant 0 : i32
    return %c0_i32, %c0_i32_0 : i32, i32
  }
  func.func @transform_3(%arg0: i32) -> (i32, i32) {
    %c0_i32 = arith.constant 0 : i32
    %c0_i32_0 = arith.constant 0 : i32
    %c0_i32_1 = arith.constant 0 : i32
    return %c0_i32, %c0_i32_0 : i32, i32
  }
  func.func @transform_4(%arg0: i32) -> (i32, i32) {
    %c0_i32 = arith.constant 0 : i32
    %c0_i32_0 = arith.constant 0 : i32
    %c0_i32_1 = arith.constant 0 : i32
    return %c0_i32, %c0_i32_0 : i32, i32
  }
  func.func @transform_5(%arg0: i32) -> (i32, i32) {
    %c0_i32 = arith.constant 0 : i32
    %c0_i32_0 = arith.constant 0 : i32
    return %arg0, %c0_i32 : i32, i32
  }
}

</mosaic_0001>

<llo_original>
// kernel: tpu_custom_call.1
$region0: #{tpu_custom_call.1}
  #allocation0 [shape = 'u32[]', space=smem, size = 0x4, offset = 0x4, fixed_abs, tag = 'smem constant byte address 0x4 - core index']
  #allocation1 [shape = 'u32[144,128]{1,0:T(1,128)}', space=vmem, size = 0x12000, scoped, tag = 'internal scratch']
  %s0 = inlined_call_operand.vmem [shape: f32[8,256], index: 0, kind: input, shape index: {}]
  %s1 = inlined_call_operand.vmem [shape: f32[32,256], index: 1, kind: input, shape index: {}]
  %s2 = inlined_call_operand.vmem [shape: f32[256,8], index: 2, kind: input, shape index: {}]
  %s3 = inlined_call_operand.vmem [shape: f32[8,256], index: 3, kind: input, shape index: {}]
  %s4 = inlined_call_operand.vmem [shape: f32[256,32], index: 4, kind: input, shape index: {}]
  %s5 = inlined_call_operand.hbm [shape: f32[8,32], index: 5, kind: output, shape index: {}]
  %s6 = sld [smem:[#allocation0]]
  $region30: #{tpu_custom_call.1} parent=0
    _
  %s8 = ssub.s32 1, %s6
  %s9 = scalar_select 0, %s8, %s6
  $region1: #{tpu_custom_call.1} parent=0
    #allocation2 [shape = 'u8[4096]{0}', space=vmem, size = 0x1000, scoped, tag = 'output window, operand 0, single buffered']
    #allocation3 [shape = 's32[1]{0}', space=sflag, size = 0x4, scoped, tag = 'scoped memory for tpu_custom_call.1']
    %10 = vsyncpa [#allocation3], 0
    // Predicated region
    $region2: #{tpu_custom_call.1} parent=1 // pred_check
      _
    $region3: #{tpu_custom_call.1} parent=1 // pred_check_branch
      %12 = sbr.rel (0) target = $region5
    $region4: #{tpu_custom_call.1} parent=1 // pred_region
      _
    $region5: #{tpu_custom_call.1} parent=1 // pred_fallthru
      _
    // Predicated region
    $region6: #{tpu_custom_call.1} parent=1 // pred_check
      _
    $region7: #{tpu_custom_call.1} parent=1 // pred_check_branch
      %14 = sbr.rel (0) target = $region9
    $region8: #{tpu_custom_call.1} parent=1 // pred_region
      _
    $region9: #{tpu_custom_call.1} parent=1 // pred_fallthru
      _
    // Predicated region
    $region10: #{tpu_custom_call.1} parent=1 // pred_check
      _
    $region11: #{tpu_custom_call.1} parent=1 // pred_check_branch
      %16 = sbr.rel (0) target = $region13
    $region12: #{tpu_custom_call.1} parent=1 // pred_region
      _
    $region13: #{tpu_custom_call.1} parent=1 // pred_fallthru
      _
    // Predicated region
    $region14: #{tpu_custom_call.1} parent=1 // pred_check
      _
    $region15: #{tpu_custom_call.1} parent=1 // pred_check_branch
      %18 = sbr.rel (0) target = $region17
    $region16: #{tpu_custom_call.1} parent=1 // pred_region
      _
    $region17: #{tpu_custom_call.1} parent=1 // pred_fallthru
      _
    // Predicated region
    $region18: #{tpu_custom_call.1} parent=1 // pred_check
      _
    $region19: #{tpu_custom_call.1} parent=1 // pred_check_branch
      %20 = sbr.rel (0) target = $region21
    $region20: #{tpu_custom_call.1} parent=1 // pred_region
      _
    $region21: #{tpu_custom_call.1} parent=1 // pred_fallthru
      _
    %v21 = vld [vmem:[%s0] sm:$0xff]
    %v22 = vld [vmem:[%s0 + $0x8] sm:$0xff]
    %v23 = vld [vmem:[%s1] sm:$0xff]
    %v24 = vld [vmem:[%s1 + $0x8] sm:$0xff]
    %v25 = vld [vmem:[%s1 + $0x10] sm:$0xff]
    %v26 = vld [vmem:[%s1 + $0x18] sm:$0xff]
    %v27 = vld [vmem:[%s1 + $0x20] sm:$0xff]
    %v28 = vld [vmem:[%s1 + $0x28] sm:$0xff]
    %v29 = vld [vmem:[%s1 + $0x30] sm:$0xff]
    %v30 = vld [vmem:[%s1 + $0x38] sm:$0xff]
    %32 = vrot.lane.b32.xlu0 %v22, 32
    %v33 = vpop.permute.xlu0 %32
    %vm34 = vcmask 261120
    %v35 = vsel %vm34, %v33, 0
    %37 = vmatprep.subr.mxu0 %v24
    %38 = vmatpush1.msra.mxu0 %v23
    %39 = vmatprep.subr.mxu0 %v26
    %40 = vmatpush1.msra.mxu0 %v25
    %41 = vmatprep.subr.mxu0 %v28
    %42 = vmatpush1.msra.mxu0 %v27
    %43 = vmatprep.subr.mxu0 %v30
    %44 = vmatpush1.msra.mxu0 %v29
    %45 = vmatprep.subr.mxu0 0.0
    %46 = vmatpush1.msra.mxu0 0.0
    %47 = vmatprep.subr.mxu0 0.0
    %48 = vmatpush1.msra.mxu0 0.0
    %49 = vmatprep.subr.mxu0 0.0
    %50 = vmatpush1.msra.mxu0 0.0
    %51 = vmatprep.subr.mxu0 0.0
    %52 = vmatpush1.msra.mxu0 0.0
    %53 = vmatprep.subr.mxu0 0.0
    %54 = vmatpush1.msra.mxu0 0.0
    %55 = vmatprep.subr.mxu0 0.0
    %56 = vmatpush1.msra.mxu0 0.0
    %57 = vmatprep.subr.mxu0 0.0
    %58 = vmatpush1.msra.mxu0 0.0
    %59 = vmatprep.subr.mxu0 0.0
    %60 = vmatpush1.msra.mxu0 0.0
    %61 = vmatprep.subr.mxu0 0.0
    %62 = vmatpush1.msra.mxu0 0.0
    %63 = vmatprep.subr.mxu0 0.0
    %64 = vmatpush1.msra.mxu0 0.0
    %65 = vmatprep.subr.mxu0 0.0
    %66 = vmatpush1.msra.mxu0 0.0
    %67 = vmatprep.subr.mxu0 0.0
    %68 = vmatpush1.msra.mxu0 0.0
    %69 = vmatprep.subr.mxu0 0.0
    %70 = vmatpush1.msra.mxu0 0.0
    %71 = vmatprep.subr.mxu0 0.0
    %72 = vmatpush1.msra.mxu0 0.0
    %73 = vmatprep.subr.mxu0 0.0
    %74 = vmatpush1.msra.mxu0 0.0
    %75 = vmatprep.subr.mxu0 0.0
    %76 = vmatpush1.msra.mxu0 0.0
    %77 = vmatprep.subr.mxu0 0.0
    %78 = vmatpush1.msra.mxu0 0.0
    %79 = vmatprep.subr.mxu0 0.0
    %80 = vmatpush1.msra.mxu0 0.0
    %81 = vmatprep.subr.mxu0 0.0
    %82 = vmatpush1.msra.mxu0 0.0
    %83 = vmatprep.subr.mxu0 0.0
    %84 = vmatpush1.msra.mxu0 0.0
    %85 = vmatprep.subr.mxu0 0.0
    %86 = vmatpush1.msra.mxu0 0.0
    %87 = vmatprep.subr.mxu0 0.0
    %88 = vmatpush1.msra.mxu0 0.0
    %89 = vmatprep.subr.mxu0 0.0
    %90 = vmatpush1.msra.mxu0 0.0
    %91 = vmatprep.subr.mxu0 0.0
    %92 = vmatpush1.msra.mxu0 0.0
    %93 = vmatprep.subr.mxu0 0.0
    %94 = vmatpush1.msra.mxu0 0.0
    %95 = vmatprep.subr.mxu0 0.0
    %96 = vmatpush1.msra.mxu0 0.0
    %97 = vmatprep.subr.mxu0 0.0
    %98 = vmatpush1.msra.mxu0 0.0
    %99 = vmatprep.subr.mxu0 0.0
    %100 = vmatpush1.msra.mxu0 0.0
    %101 = vmatprep.mubr.f32.mxu0 0.0
    %102 = vmatmul.mubr.f32.gmra.mrb[0].mxu0 %v35
    %v103 = vpop.f32.mrb[0].mxu0
    %v104 = vadd.f32 0.0, %v103
    %v105 = vpop.f32.mrb[0].mxu0
    %v106 = vadd.f32 0.0, %v105
    %107 = vdwg.mxu0
    %v108 = vmul.f32 %v21, %v104
    %v109 = vmul.f32 %v22, %v106
    %v110 = vld [vmem:[%s2] sm:$0xff]
    %v111 = vld [vmem:[%s2 + $0x8] sm:$0xff]
    %v112 = vld [vmem:[%s2 + $0x10] sm:$0xff]
    %v113 = vld [vmem:[%s2 + $0x18] sm:$0xff]
    %v114 = vld [vmem:[%s2 + $0x20] sm:$0xff]
    %v115 = vld [vmem:[%s2 + $0x28] sm:$0xff]
    %v116 = vld [vmem:[%s2 + $0x30] sm:$0xff]
    %v117 = vld [vmem:[%s2 + $0x38] sm:$0xff]
    %v118 = vld [vmem:[%s2 + $0x40] sm:$0xff]
    %v119 = vld [vmem:[%s2 + $0x48] sm:$0xff]
    %v120 = vld [vmem:[%s2 + $0x50] sm:$0xff]
    %v121 = vld [vmem:[%s2 + $0x58] sm:$0xff]
    %v122 = vld [vmem:[%s2 + $0x60] sm:$0xff]
    %v123 = vld [vmem:[%s2 + $0x68] sm:$0xff]
    %v124 = vld [vmem:[%s2 + $0x70] sm:$0xff]
    %v125 = vld [vmem:[%s2 + $0x78] sm:$0xff]
    %v126 = vld [vmem:[%s2 + $0x80] sm:$0xff]
    %v127 = vld [vmem:[%s2 + $0x88] sm:$0xff]
    %v128 = vld [vmem:[%s2 + $0x90] sm:$0xff]
    %v129 = vld [vmem:[%s2 + $0x98] sm:$0xff]
    %v130 = vld [vmem:[%s2 + $0xa0] sm:$0xff]
    %v131 = vld [vmem:[%s2 + $0xa8] sm:$0xff]
    %v132 = vld [vmem:[%s2 + $0xb0] sm:$0xff]
    %v133 = vld [vmem:[%s2 + $0xb8] sm:$0xff]
    %v134 = vld [vmem:[%s2 + $0xc0] sm:$0xff]
    %v135 = vld [vmem:[%s2 + $0xc8] sm:$0xff]
    %v136 = vld [vmem:[%s2 + $0xd0] sm:$0xff]
    %v137 = vld [vmem:[%s2 + $0xd8] sm:$0xff]
    %v138 = vld [vmem:[%s2 + $0xe0] sm:$0xff]
    %v139 = vld [vmem:[%s2 + $0xe8] sm:$0xff]
    %v140 = vld [vmem:[%s2 + $0xf0] sm:$0xff]
    %v141 = vld [vmem:[%s2 + $0xf8] sm:$0xff]
    %142 = vmatprep.subr.mxu0 0.0
    %143 = vmatpush1.msra.mxu0 %v110
    %144 = vmatprep.subr.mxu0 0.0
    %145 = vmatpush1.msra.mxu0 %v111
    %146 = vmatprep.subr.mxu0 0.0
    %147 = vmatpush1.msra.mxu0 %v112
    %148 = vmatprep.subr.mxu0 0.0
    %149 = vmatpush1.msra.mxu0 %v113
    %150 = vmatprep.subr.mxu0 0.0
    %151 = vmatpush1.msra.mxu0 %v114
    %152 = vmatprep.subr.mxu0 0.0
    %153 = vmatpush1.msra.mxu0 %v115
    %154 = vmatprep.subr.mxu0 0.0
    %155 = vmatpush1.msra.mxu0 %v116
    %156 = vmatprep.subr.mxu0 0.0
    %157 = vmatpush1.msra.mxu0 %v117
    %158 = vmatprep.subr.mxu0 0.0
    %159 = vmatpush1.msra.mxu0 %v118
    %160 = vmatprep.subr.mxu0 0.0
    %161 = vmatpush1.msra.mxu0 %v119
    %162 = vmatprep.subr.mxu0 0.0
    %163 = vmatpush1.msra.mxu0 %v120
    %164 = vmatprep.subr.mxu0 0.0
    %165 = vmatpush1.msra.mxu0 %v121
    %166 = vmatprep.subr.mxu0 0.0
    %167 = vmatpush1.msra.mxu0 %v122
    %168 = vmatprep.subr.mxu0 0.0
    %169 = vmatpush1.msra.mxu0 %v123
    %170 = vmatprep.subr.mxu0 0.0
    %171 = vmatpush1.msra.mxu0 %v124
    %172 = vmatprep.subr.mxu0 0.0
    %173 = vmatpush1.msra.mxu0 %v125
    %174 = vmatprep.subr.mxu0 0.0
    %175 = vmatpush1.msra.mxu0 %v126
    %176 = vmatprep.subr.mxu0 0.0
    %177 = vmatpush1.msra.mxu0 %v127
    %178 = vmatprep.subr.mxu0 0.0
    %179 = vmatpush1.msra.mxu0 %v128
    %180 = vmatprep.subr.mxu0 0.0
    %181 = vmatpush1.msra.mxu0 %v129
    %182 = vmatprep.subr.mxu0 0.0
    %183 = vmatpush1.msra.mxu0 %v130
    %184 = vmatprep.subr.mxu0 0.0
    %185 = vmatpush1.msra.mxu0 %v131
    %186 = vmatprep.subr.mxu0 0.0
    %187 = vmatpush1.msra.mxu0 %v132
    %188 = vmatprep.subr.mxu0 0.0
    %189 = vmatpush1.msra.mxu0 %v133
    %190 = vmatprep.subr.mxu0 0.0
    %191 = vmatpush1.msra.mxu0 %v134
    %192 = vmatprep.subr.mxu0 0.0
    %193 = vmatpush1.msra.mxu0 %v135
    %194 = vmatprep.subr.mxu0 0.0
    %195 = vmatpush1.msra.mxu0 %v136
    %196 = vmatprep.subr.mxu0 0.0
    %197 = vmatpush1.msra.mxu0 %v137
    %198 = vmatprep.subr.mxu0 0.0
    %199 = vmatpush1.msra.mxu0 %v138
    %200 = vmatprep.subr.mxu0 0.0
    %201 = vmatpush1.msra.mxu0 %v139
    %202 = vmatprep.subr.mxu0 0.0
    %203 = vmatpush1.msra.mxu0 %v140
    %204 = vmatprep.subr.mxu0 0.0
    %205 = vmatpush1.msra.mxu0 %v141
    %206 = vmatprep.mubr.f32.mxu0 %v109
    %207 = vmatmul.mubr.f32.gmra.mrb[0].mxu0 %v108
    %v208 = vpop.f32.mrb[0].mxu0
    %v209 = vadd.f32 0.0, %v208
    %v210 = vpop.f32.mrb[0].mxu0
    %211 = vdwg.mxu0
    %vm212 = vcmask 64512
    %v213 = vsel %vm212, %v209, -inf
    %214 = vmax.xlane.f32.xlu0 %v213
    %v215 = vpop.xlane.xlu0 %214
    %v216 = vsub.f32 %v209, %v215
    %v217 = vmul.f32 %v216, 1.442695
    %v218 = vpow.pop %v217
    %v219 = vsel %vm212, %v218, 0.0
    %220 = vadd.xlane.f32.xlu0 %v219
    %v221 = vpop.xlane.xlu0 %220
    %v222 = vrcp.pop %v221
    %v223 = vmul.f32 %v218, %v222
    %v224 = vld [vmem:[%s3] sm:$0xff]
    %v225 = vld [vmem:[%s3 + $0x8] sm:$0xff]
    %v227 = vsel %vm212, %v223, 0
    %229 = vmatprep.subr.mxu0 %v225
    %230 = vmatpush1.msra.mxu0 %v224
    %231 = vmatprep.subr.mxu0 0.0
    %232 = vmatpush1.msra.mxu0 0.0
    %233 = vmatprep.subr.mxu0 0.0
    %234 = vmatpush1.msra.mxu0 0.0
    %235 = vmatprep.subr.mxu0 0.0
    %236 = vmatpush1.msra.mxu0 0.0
    %237 = vmatprep.subr.mxu0 0.0
    %238 = vmatpush1.msra.mxu0 0.0
    %239 = vmatprep.subr.mxu0 0.0
    %240 = vmatpush1.msra.mxu0 0.0
    %241 = vmatprep.subr.mxu0 0.0
    %242 = vmatpush1.msra.mxu0 0.0
    %243 = vmatprep.subr.mxu0 0.0
    %244 = vmatpush1.msra.mxu0 0.0
    %245 = vmatprep.subr.mxu0 0.0
    %246 = vmatpush1.msra.mxu0 0.0
    %247 = vmatprep.subr.mxu0 0.0
    %248 = vmatpush1.msra.mxu0 0.0
    %249 = vmatprep.subr.mxu0 0.0
    %250 = vmatpush1.msra.mxu0 0.0
    %251 = vmatprep.subr.mxu0 0.0
    %252 = vmatpush1.msra.mxu0 0.0
    %253 = vmatprep.subr.mxu0 0.0
    %254 = vmatpush1.msra.mxu0 0.0
    %255 = vmatprep.subr.mxu0 0.0
    %256 = vmatpush1.msra.mxu0 0.0
    %257 = vmatprep.subr.mxu0 0.0
    %258 = vmatpush1.msra.mxu0 0.0
    %259 = vmatprep.subr.mxu0 0.0
    %260 = vmatpush1.msra.mxu0 0.0
    %261 = vmatprep.subr.mxu0 0.0
    %262 = vmatpush1.msra.mxu0 0.0
    %263 = vmatprep.subr.mxu0 0.0
    %264 = vmatpush1.msra.mxu0 0.0
    %265 = vmatprep.subr.mxu0 0.0
    %266 = vmatpush1.msra.mxu0 0.0
    %267 = vmatprep.subr.mxu0 0.0
    %268 = vmatpush1.msra.mxu0 0.0
    %269 = vmatprep.subr.mxu0 0.0
    %270 = vmatpush1.msra.mxu0 0.0
    %271 = vmatprep.subr.mxu0 0.0
    %272 = vmatpush1.msra.mxu0 0.0
    %273 = vmatprep.subr.mxu0 0.0
    %274 = vmatpush1.msra.mxu0 0.0
    %275 = vmatprep.subr.mxu0 0.0
    %276 = vmatpush1.msra.mxu0 0.0
    %277 = vmatprep.subr.mxu0 0.0
    %278 = vmatpush1.msra.mxu0 0.0
    %279 = vmatprep.subr.mxu0 0.0
    %280 = vmatpush1.msra.mxu0 0.0
    %281 = vmatprep.subr.mxu0 0.0
    %282 = vmatpush1.msra.mxu0 0.0
    %283 = vmatprep.subr.mxu0 0.0
    %284 = vmatpush1.msra.mxu0 0.0
    %285 = vmatprep.subr.mxu0 0.0
    %286 = vmatpush1.msra.mxu0 0.0
    %287 = vmatprep.subr.mxu0 0.0
    %288 = vmatpush1.msra.mxu0 0.0
    %289 = vmatprep.subr.mxu0 0.0
    %290 = vmatpush1.msra.mxu0 0.0
    %291 = vmatprep.subr.mxu0 0.0
    %292 = vmatpush1.msra.mxu0 0.0
    %293 = vmatprep.mubr.f32.mxu0 0.0
    %294 = vmatmul.mubr.f32.gmra.mrb[0].mxu0 %v227
    %v295 = vpop.f32.mrb[0].mxu0
    %v296 = vadd.f32 0.0, %v295
    %v297 = vpop.f32.mrb[0].mxu0
    %v298 = vadd.f32 0.0, %v297
    %299 = vdwg.mxu0
    %v300 = vmul.f32 %v296, %v21
    %v301 = vmul.f32 %v298, %v22
    %v302 = vld [vmem:[%s4] sm:$0xff]
    %v303 = vld [vmem:[%s4 + $0x8] sm:$0xff]
    %v304 = vld [vmem:[%s4 + $0x10] sm:$0xff]
    %v305 = vld [vmem:[%s4 + $0x18] sm:$0xff]
    %v306 = vld [vmem:[%s4 + $0x20] sm:$0xff]
    %v307 = vld [vmem:[%s4 + $0x28] sm:$0xff]
    %v308 = vld [vmem:[%s4 + $0x30] sm:$0xff]
    %v309 = vld [vmem:[%s4 + $0x38] sm:$0xff]
    %v310 = vld [vmem:[%s4 + $0x40] sm:$0xff]
    %v311 = vld [vmem:[%s4 + $0x48] sm:$0xff]
    %v312 = vld [vmem:[%s4 + $0x50] sm:$0xff]
    %v313 = vld [vmem:[%s4 + $0x58] sm:$0xff]
    %v314 = vld [vmem:[%s4 + $0x60] sm:$0xff]
    %v315 = vld [vmem:[%s4 + $0x68] sm:$0xff]
    %v316 = vld [vmem:[%s4 + $0x70] sm:$0xff]
    %v317 = vld [vmem:[%s4 + $0x78] sm:$0xff]
    %v318 = vld [vmem:[%s4 + $0x80] sm:$0xff]
    %v319 = vld [vmem:[%s4 + $0x88] sm:$0xff]
    %v320 = vld [vmem:[%s4 + $0x90] sm:$0xff]
    %v321 = vld [vmem:[%s4 + $0x98] sm:$0xff]
    %v322 = vld [vmem:[%s4 + $0xa0] sm:$0xff]
    %v323 = vld [vmem:[%s4 + $0xa8] sm:$0xff]
    %v324 = vld [vmem:[%s4 + $0xb0] sm:$0xff]
    %v325 = vld [vmem:[%s4 + $0xb8] sm:$0xff]
    %v326 = vld [vmem:[%s4 + $0xc0] sm:$0xff]
    %v327 = vld [vmem:[%s4 + $0xc8] sm:$0xff]
    %v328 = vld [vmem:[%s4 + $0xd0] sm:$0xff]
    %v329 = vld [vmem:[%s4 + $0xd8] sm:$0xff]
    %v330 = vld [vmem:[%s4 + $0xe0] sm:$0xff]
    %v331 = vld [vmem:[%s4 + $0xe8] sm:$0xff]
    %v332 = vld [vmem:[%s4 + $0xf0] sm:$0xff]
    %v333 = vld [vmem:[%s4 + $0xf8] sm:$0xff]
    %334 = vmatprep.subr.mxu0 0.0
    %335 = vmatpush1.msra.mxu0 %v302
    %336 = vmatprep.subr.mxu0 0.0
    %337 = vmatpush1.msra.mxu0 %v303
    %338 = vmatprep.subr.mxu0 0.0
    %339 = vmatpush1.msra.mxu0 %v304
    %340 = vmatprep.subr.mxu0 0.0
    %341 = vmatpush1.msra.mxu0 %v305
    %342 = vmatprep.subr.mxu0 0.0
    %343 = vmatpush1.msra.mxu0 %v306
    %344 = vmatprep.subr.mxu0 0.0
    %345 = vmatpush1.msra.mxu0 %v307
    %346 = vmatprep.subr.mxu0 0.0
    %347 = vmatpush1.msra.mxu0 %v308
    %348 = vmatprep.subr.mxu0 0.0
    %349 = vmatpush1.msra.mxu0 %v309
    %350 = vmatprep.subr.mxu0 0.0
    %351 = vmatpush1.msra.mxu0 %v310
    %352 = vmatprep.subr.mxu0 0.0
    %353 = vmatpush1.msra.mxu0 %v311
    %354 = vmatprep.subr.mxu0 0.0
    %355 = vmatpush1.msra.mxu0 %v312
    %356 = vmatprep.subr.mxu0 0.0
    %357 = vmatpush1.msra.mxu0 %v313
    %358 = vmatprep.subr.mxu0 0.0
    %359 = vmatpush1.msra.mxu0 %v314
    %360 = vmatprep.subr.mxu0 0.0
    %361 = vmatpush1.msra.mxu0 %v315
    %362 = vmatprep.subr.mxu0 0.0
    %363 = vmatpush1.msra.mxu0 %v316
    %364 = vmatprep.subr.mxu0 0.0
    %365 = vmatpush1.msra.mxu0 %v317
    %366 = vmatprep.subr.mxu0 0.0
    %367 = vmatpush1.msra.mxu0 %v318
    %368 = vmatprep.subr.mxu0 0.0
    %369 = vmatpush1.msra.mxu0 %v319
    %370 = vmatprep.subr.mxu0 0.0
    %371 = vmatpush1.msra.mxu0 %v320
    %372 = vmatprep.subr.mxu0 0.0
    %373 = vmatpush1.msra.mxu0 %v321
    %374 = vmatprep.subr.mxu0 0.0
    %375 = vmatpush1.msra.mxu0 %v322
    %376 = vmatprep.subr.mxu0 0.0
    %377 = vmatpush1.msra.mxu0 %v323
    %378 = vmatprep.subr.mxu0 0.0
    %379 = vmatpush1.msra.mxu0 %v324
    %380 = vmatprep.subr.mxu0 0.0
    %381 = vmatpush1.msra.mxu0 %v325
    %382 = vmatprep.subr.mxu0 0.0
    %383 = vmatpush1.msra.mxu0 %v326
    %384 = vmatprep.subr.mxu0 0.0
    %385 = vmatpush1.msra.mxu0 %v327
    %386 = vmatprep.subr.mxu0 0.0
    %387 = vmatpush1.msra.mxu0 %v328
    %388 = vmatprep.subr.mxu0 0.0
    %389 = vmatpush1.msra.mxu0 %v329
    %390 = vmatprep.subr.mxu0 0.0
    %391 = vmatpush1.msra.mxu0 %v330
    %392 = vmatprep.subr.mxu0 0.0
    %393 = vmatpush1.msra.mxu0 %v331
    %394 = vmatprep.subr.mxu0 0.0
    %395 = vmatpush1.msra.mxu0 %v332
    %396 = vmatprep.subr.mxu0 0.0
    %397 = vmatpush1.msra.mxu0 %v333
    %398 = vmatprep.mubr.f32.mxu0 %v301
    %399 = vmatmul.mubr.f32.gmra.mrb[0].mxu0 %v300
    %v400 = vpop.f32.mrb[0].mxu0
    %v401 = vadd.f32 0.0, %v400
    %v402 = vpop.f32.mrb[0].mxu0
    %403 = vdwg.mxu0
    %404 = vst.msk [vmem:[#allocation2] sm:$0xff] %vm34, %v401
    // Predicated region
    $region22: #{tpu_custom_call.1} parent=1 // pred_check
      _
    $region23: #{tpu_custom_call.1} parent=1 // pred_check_branch
      %406 = sbr.rel (0) target = $region25
    $region24: #{tpu_custom_call.1} parent=1 // pred_region
      %s408 = ssub.s32 128, 128
      %409 = vsyncadd [#allocation3], %s408
      %s411 = sshll.u32 [#allocation2], 4
      %s412 = int_to_ptr.vmem [resolvable:$true] %s411
      %414 = dma.vmem_to_hbm [thread:$0]  %s412, 128, %s5, [#allocation3]
    $region25: #{tpu_custom_call.1} parent=1 // pred_fallthru
      _
    // Predicated region
    $region26: #{tpu_custom_call.1} parent=1 // pred_check
      _
    $region27: #{tpu_custom_call.1} parent=1 // pred_check_branch
      %416 = sbr.rel (0) target = $region29
    $region28: #{tpu_custom_call.1} parent=1 // pred_region
      %417 = dma.done [#allocation3], 128
    $region29: #{tpu_custom_call.1} parent=1 // pred_fallthru
      _
    %418 = vsyncpa [#allocation3], 1

</llo_original>
